<compile_context>
chip_gen: v5e
topology: v5e:2x2
jax: 0.10.0
libtpu: 0.0.40
codegen_flags: <defaults>
</compile_context>

<pallas_src>
import functools

import jax
import jax.numpy as jnp
from jax.experimental import pallas as pl
from jax.experimental.pallas import tpu as pltpu


_LANE = 128                               # lane tiling (last dim)
_MAX_BLOCK_BYTES = 8 * 1024 * 1024        # per input buffer (x2: double-buffered)
_MAX_L_TILE = 8192                        # lane-tile cap in the fallback path
_VMEM_LIMIT_BYTES = 48 * 1024 * 1024      # <= v7x 64 MiB physical; fine on v5e/v6e


def _round_up(x: int, m: int) -> int:
    return (x + m - 1) // m * m


def _sublane(dtype) -> int:
    """Sublane granularity: 8 for 4-byte, 16 for 2-byte, 32 for 1-byte dtypes."""
    return max(8, 32 // jnp.dtype(dtype).itemsize)


# ---------------------------------------------------------------------------
# Fast path: full-L contiguous blocks, rows-only grid, no scratch.
# ---------------------------------------------------------------------------

def _gap1d_full_l_kernel(x_ref, o_ref, *, inv_len):
    # The f32 upcast is fused into the reduction; the mean is a single multiply.
    o_ref[...] = (jnp.sum(x_ref[...], axis=-1, keepdims=True, dtype=jnp.float32)
                  * inv_len).astype(o_ref.dtype)


def _choose_row_tile_full_l(R: int, L: int, itemsize: int, sub: int,
                            block_bytes: int) -> int:
    """Row tile for the full-L path: sublane-granular, within the block budget,
    and >= 2 balanced tiles whenever R allows (v7x has 2 TensorCores and only
    the 'parallel' row axis shards across them)."""
    if R <= sub:
        return R                          # single full-dim tile (always legal)
    row_bytes = L * itemsize
    rows_budget = max(sub, (block_bytes // row_bytes) // sub * sub)
    half = max(sub, _round_up(pl.cdiv(_round_up(R, sub), 2), sub))
    return min(rows_budget, half)


# ---------------------------------------------------------------------------
# Fallback: very long sequences -> L-tiled reduction with f32 accumulator.
# ---------------------------------------------------------------------------

def _gap1d_tiled_kernel(x_ref, o_ref, acc_ref, *, inv_len, seq_len, tile_l,
                        lane_chunks, ragged):
    l = pl.program_id(1)

    @pl.when(l == 0)
    def _init():
        acc_ref[...] = jnp.zeros_like(acc_ref)

    x = x_ref[...]
    if ragged:
        # The last L block overhangs (R, L): its out-of-bounds tail columns
        # hold unspecified data and must be zeroed before touching valid rows.
        col = jax.lax.broadcasted_iota(jnp.int32, x.shape, 1)
        x = jnp.where(col < seq_len - l * tile_l, x, jnp.zeros_like(x))

    # Lane-dense partial sum: add the TL/128 lane chunks elementwise (pure
    # VPU); the cross-lane (XLU) reduce is deferred to the finalize branch.
    partial = x[:, :_LANE].astype(jnp.float32)
    for c in range(1, lane_chunks):
        partial = partial + x[:, c * _LANE:(c + 1) * _LANE].astype(jnp.float32)
    acc_ref[...] += partial

    @pl.when(l == pl.num_programs(1) - 1)
    def _finalize():
        o_ref[...] = (jnp.sum(acc_ref[...], axis=-1, keepdims=True)
                      * inv_len).astype(o_ref.dtype)


def _choose_fallback_tiles(R: int, L: int, itemsize: int, sub: int,
                           block_bytes: int):
    # Row tile: sublane-granular; modest so the lane tile can be wide, and
    # >= 2 row tiles when R allows (v7x megacore).
    if R <= sub:
        tr = R
    else:
        tr = min(256, max(sub, _round_up(pl.cdiv(_round_up(R, sub), 2), sub)))
    # Lane tile: fill the block budget; always a multiple of 128; capped so the
    # unrolled in-kernel chunk loop stays short.
    tl = (block_bytes // (max(tr, 1) * itemsize)) // _LANE * _LANE
    tl = max(_LANE, min(tl, _MAX_L_TILE, _round_up(L, _LANE)))
    # Prefer a lane tile that divides L exactly (no masked tail block).
    if L % tl != 0:
        for cand in range(tl, _LANE - 1, -_LANE):
            if L % cand == 0:
                tl = cand
                break
    return tr, tl


# ---------------------------------------------------------------------------
# Public wrapper.
# ---------------------------------------------------------------------------

def gap1d(x: jax.Array, *, max_block_bytes: int = _MAX_BLOCK_BYTES) -> jax.Array:
    """AdaptiveAvgPool1d(1) + flatten: (B, C, L) -> (B, C)."""
    assert x.ndim == 3, "expected (batch, channels, seq_len)"
    B, C, L = x.shape
    R = B * C
    dtype = x.dtype
    itemsize = jnp.dtype(dtype).itemsize
    sub = _sublane(dtype)
    inv_len = 1.0 / L
    xr = x.reshape(R, L)   # free relayout: (B, C, L) is contiguous in (R, L)

    if sub * L * itemsize <= max_block_bytes:
        # Fast path: full-L contiguous blocks, rows-only "parallel" grid.
        tr = _choose_row_tile_full_l(R, L, itemsize, sub, max_block_bytes)
        out = pl.pallas_call(
            functools.partial(_gap1d_full_l_kernel, inv_len=inv_len),
            out_shape=jax.ShapeDtypeStruct((R, 1), dtype),
            grid=(pl.cdiv(R, tr),),
            in_specs=[pl.BlockSpec((tr, L), lambda r: (r, 0))],
            out_specs=pl.BlockSpec((tr, 1), lambda r: (r, 0)),
            compiler_params=pltpu.CompilerParams(
                dimension_semantics=("parallel",),
                vmem_limit_bytes=_VMEM_LIMIT_BYTES,
            ),
        )(xr)
    else:
        # Very long sequences: tile L (reduction axis last, "arbitrary") with a
        # lane-dense f32 accumulator in VMEM scratch.
        # NOTE: a ragged last *row* tile is fine — garbage rows only land in
        # output rows beyond R, which Pallas masks on store.
        # TODO(synk): for tiny-R / huge-L on v7x, both TCs could be engaged by
        # splitting L into two "parallel" halves combined in the wrapper.
        tr, tl = _choose_fallback_tiles(R, L, itemsize, sub, max_block_bytes)
        out = pl.pallas_call(
            functools.partial(_gap1d_tiled_kernel, inv_len=inv_len, seq_len=L,
                              tile_l=tl, lane_chunks=tl // _LANE,
                              ragged=(L % tl != 0)),
            out_shape=jax.ShapeDtypeStruct((R, 1), dtype),
            grid=(pl.cdiv(R, tr), pl.cdiv(L, tl)),
            in_specs=[pl.BlockSpec((tr, tl), lambda r, l: (r, l))],
            out_specs=pl.BlockSpec((tr, 1), lambda r, l: (r, 0)),
            scratch_shapes=[pltpu.VMEM((tr, _LANE), jnp.float32)],
            compiler_params=pltpu.CompilerParams(
                dimension_semantics=("parallel", "arbitrary"),
                vmem_limit_bytes=_VMEM_LIMIT_BYTES,
            ),
        )(xr)

    # Reshape() flatten: (B, C, 1) -> (B, C)
    return out.reshape(B, C)


# TODO(synk): AdaptiveAvgPool1d with output_size > 1 is not implemented; GAP1d's
# default (and the global-pooling hot path) is output_size=1, which this covers.


if __name__ == "__main__":
    # Small shape implied by the module: (batch, channels, seq_len).
    B, C, L = 2, 4, 16
    x = jax.random.normal(jax.random.PRNGKey(0), (B, C, L), dtype=jnp.float32)
    out = gap1d(x)
    jax.block_until_ready(out)
    ref = jnp.mean(x, axis=-1)
    assert out.shape == (B, C)
    assert jnp.allclose(out, ref, atol=1e-6, rtol=1e-6)

    # Larger shape exercising the fast path with multiple row tiles
    # (two balanced (192, 2304) blocks -> both TensorCores on v7x).
    B2, C2, L2 = 4, 96, 2304
    x2 = jax.random.normal(jax.random.PRNGKey(1), (B2, C2, L2), dtype=jnp.float32)
    out2 = gap1d(x2)
    jax.block_until_ready(out2)
    ref2 = jnp.mean(x2, axis=-1)
    assert out2.shape == (B2, C2)
    assert jnp.allclose(out2, ref2, atol=1e-5, rtol=1e-5)

    # Exercise the long-sequence fallback (L-tiled grid, lane-dense f32
    # accumulator, masked ragged tail) at a small shape via a tiny block budget.
    B3, C3, L3 = 2, 4, 1000
    x3 = jax.random.normal(jax.random.PRNGKey(2), (B3, C3, L3), dtype=jnp.float32)
    out3 = gap1d(x3, max_block_bytes=16 * 1024)
    jax.block_until_ready(out3)
    ref3 = jnp.mean(x3, axis=-1)
    assert out3.shape == (B3, C3)
    assert jnp.allclose(out3, ref3, atol=1e-5, rtol=1e-5)

    print("KERNEL_OK")
</pallas_src>

<mosaic_0001>
module attributes {stable_mosaic.version = 11 : i64} {
  func.func @_gap1d_full_l_kernel(%arg0: i32, %arg1: memref<8x16xf32, #tpu.memory_space<vmem>>, %arg2: memref<8x1xf32, #tpu.memory_space<vmem>>) attributes {dimension_semantics = [#tpu.dimension_semantics<parallel>], iteration_bounds = array<i64: 1>, scalar_prefetch = 0 : i64, scratch_operands = 0 : i64, tpu.core_type = #tpu.core_type<tc>, window_params = [{transform_indices = @transform_0, window_bounds = array<i64: 8, 16>}, {transform_indices = @transform_1, window_bounds = array<i64: 8, 1>}]} {
    %c0 = arith.constant 0 : index
    %c0_0 = arith.constant 0 : index
    %0 = vector.load %arg1[%c0, %c0_0] : memref<8x16xf32, #tpu.memory_space<vmem>>, vector<8x16xf32>
    %cst = arith.constant dense<0.000000e+00> : vector<8xf32>
    %1 = vector.multi_reduction <add>, %0, %cst [1] : vector<8x16xf32> to vector<8xf32>
    %2 = vector.shape_cast %1 : vector<8xf32> to vector<8x1xf32>
    %cst_1 = arith.constant 6.250000e-02 : f32
    %3 = vector.broadcast %cst_1 : f32 to vector<8x1xf32>
    %4 = arith.mulf %2, %3 : vector<8x1xf32>
    %c0_2 = arith.constant 0 : index
    %c0_3 = arith.constant 0 : index
    %5 = vector.load %arg2[%c0_2, %c0_3] : memref<8x1xf32, #tpu.memory_space<vmem>>, vector<8x1xf32>
    tpu.vector_store %arg2[%c0_2, %c0_3], %4 {strides = array<i32>} : memref<8x1xf32, #tpu.memory_space<vmem>>, vector<8x1xf32>,
    return
  }
  func.func @transform_0(%arg0: i32) -> (i32, i32) {
    %c0_i32 = arith.constant 0 : i32
    %c0_i32_0 = arith.constant 0 : i32
    return %arg0, %c0_i32 : i32, i32
  }
  func.func @transform_1(%arg0: i32) -> (i32, i32) {
    %c0_i32 = arith.constant 0 : i32
    %c0_i32_0 = arith.constant 0 : i32
    return %arg0, %c0_i32 : i32, i32
  }
}

</mosaic_0001>

<llo_original>
// kernel: tpu_custom_call.1
$region0: #{tpu_custom_call.1}
  #allocation0 [shape = 'u32[]', space=smem, size = 0x4, offset = 0x4, fixed_abs, tag = 'smem constant byte address 0x4 - core index']
  #allocation1 [shape = 'u32[72,128]{1,0:T(1,128)}', space=vmem, size = 0x9000, scoped, tag = 'internal scratch']
  %s0 = inlined_call_operand.hbm [shape: f32[8,16], index: 0, kind: input, shape index: {}]
  %s1 = inlined_call_operand.vmem [shape: f32[8,1], index: 1, kind: output, shape index: {}]
  %s2 = sld [smem:[#allocation0]]
  $region18: #{tpu_custom_call.1} parent=0
    _
  %s4 = ssub.s32 1, %s2
  %s5 = scalar_select 0, %s4, %s2
  $region1: #{tpu_custom_call.1} parent=0
    #allocation2 [shape = 'u8[4096]{0}', space=vmem, size = 0x1000, scoped, tag = 'input window, operand 0, single buffered']
    #allocation3 [shape = 's32[1]{0}', space=sflag, size = 0x4, scoped, tag = 'scoped memory for tpu_custom_call.1']
    %6 = vsyncpa [#allocation3], 0
    // Predicated region
    $region2: #{tpu_custom_call.1} parent=1 // pred_check
      _
    $region3: #{tpu_custom_call.1} parent=1 // pred_check_branch
      %8 = sbr.rel (0) target = $region5
    $region4: #{tpu_custom_call.1} parent=1 // pred_region
      %10 = vsyncadd [#allocation3], 0
      %s12 = sshll.u32 %s0, 4
      %s13 = int_to_ptr.hbm [resolvable:$true] %s12
      %s14 = sshll.u32 [#allocation2], 4
      %s15 = int_to_ptr.vmem [resolvable:$true] %s14
      %17 = dma.hbm_to_vmem [thread:$0]  %s13, 128, %s15, [#allocation3]
    $region5: #{tpu_custom_call.1} parent=1 // pred_fallthru
      _
    // Predicated region
    $region6: #{tpu_custom_call.1} parent=1 // pred_check
      _
    $region7: #{tpu_custom_call.1} parent=1 // pred_check_branch
      %19 = sbr.rel (0) target = $region9
    $region8: #{tpu_custom_call.1} parent=1 // pred_region
      %21 = dma.done [#allocation3], 128
    $region9: #{tpu_custom_call.1} parent=1 // pred_fallthru
      _
    %v22 = vld [vmem:[#allocation2] sm:$0xff]
    %vm23 = vcmask 130048
    %v24 = vsel %vm23, %v22, 0.0
    %25 = vadd.xlane.f32.xlu0 %v24
    %v26 = vpop.xlane.xlu0 %25
    %v27 = vmul.f32 %v26, 0.0625
    %vm28 = vcmask 7168
    %29 = vst.msk [vmem:[%s1] sm:$0xff] %vm28, %v27
    // Predicated region
    $region10: #{tpu_custom_call.1} parent=1 // pred_check
      _
    $region11: #{tpu_custom_call.1} parent=1 // pred_check_branch
      %31 = sbr.rel (0) target = $region13
    $region12: #{tpu_custom_call.1} parent=1 // pred_region
      _
    $region13: #{tpu_custom_call.1} parent=1 // pred_fallthru
      _
    // Predicated region
    $region14: #{tpu_custom_call.1} parent=1 // pred_check
      _
    $region15: #{tpu_custom_call.1} parent=1 // pred_check_branch
      %33 = sbr.rel (0) target = $region17
    $region16: #{tpu_custom_call.1} parent=1 // pred_region
      _
    $region17: #{tpu_custom_call.1} parent=1 // pred_fallthru
      _
    %34 = vsyncpa [#allocation3], 1

</llo_original>
